<compile_context>
chip_gen: v7x
topology: tpu7x:2x2x1
jax: 0.10.0
libtpu: 0.0.40
codegen_flags: <defaults>
</compile_context>

<pallas_src>
import jax
import jax.numpy as jnp
from jax.experimental import pallas as pl
from jax.experimental.pallas import tpu as pltpu

_X_TILE_VMEM_BUDGET = 32 * 1024 * 1024   # bytes for the double-buffered x tile
_VMEM_LIMIT_BYTES = 48 * 1024 * 1024     # scoped VMEM limit passed to Mosaic


def mlp_kernel(x_ref, w1_ref, b1_ref, w2t_ref, b2_ref, w3t_ref, b3_ref, o_ref):
    x = x_ref[...]                                                    # (tb, D)

    # Layer 1 on the MXU: (tb, D) @ (D, 8), f32 accumulate; bias broadcasts over rows.
    h1 = jnp.dot(x, w1_ref[...], preferred_element_type=jnp.float32) + b1_ref[...]
    h1 = jnp.maximum(h1, 0.0)                                         # (tb, 8)
    # dropout -> identity (eval)

    # Switch to batch-on-lanes layout: tiny (tb, 8) XLU transpose (free filler
    # under the DMA-bound roofline) so the remaining layers are lane-dense.
    h1t = h1.T                                                        # (8, tb)

    # Layer 2: (4, 8) @ (8, tb) — full-lane-width N, bias column broadcasts over lanes.
    h2t = jnp.dot(w2t_ref[...], h1t, preferred_element_type=jnp.float32) + b2_ref[...]
    h2t = jnp.maximum(h2t, 0.0)                                       # (4, tb)
    # dropout -> identity (eval)

    # Layer 3: (1, 4) @ (4, tb) — result is already lane-dense for the store.
    outt = jnp.dot(w3t_ref[...], h2t, preferred_element_type=jnp.float32) + b3_ref[...]
    o_ref[...] = outt.astype(o_ref.dtype)                             # (1, tb) dense vst


def _choose_tb(B, D):
    """Largest batch tile that fits the VMEM budget, multiple of 128, >=2 grid steps."""
    if B <= 1024:
        # Small batch: a single tile covers everything (block == full array, so no
        # (8,128) divisibility constraints apply).
        return B
    rows_cap = _X_TILE_VMEM_BUDGET // (2 * D * 4)     # double-buffered f32 x tile
    tb = min(2048, rows_cap, B // 2)                  # cap + keep grid >= 2 steps
    tb = max(128, (tb // 128) * 128)                  # lane-dense out block needs %128
    return tb


def _const_spec(shape):
    return pl.BlockSpec(shape, lambda i: (0,) * len(shape))


def mlp_forward(x, params, *, tb=None):
    """x: (B, D) float32. params: w1 (D,8), b1 (1,8), w2 (8,4), b2 (1,4), w3 (4,1), b3 (1,1)."""
    B, D = x.shape
    f32 = jnp.float32
    x = x.astype(f32)

    if tb is None:
        tb = _choose_tb(B, D)
    nb = pl.cdiv(B, tb)
    assert nb == 1 or tb % 128 == 0, "when tiling (grid > 1), tb must be a multiple of 128"

    # Pad the batch so B_pad is a multiple of tb (padded rows are sliced off below).
    B_pad = nb * tb
    if B_pad != B:
        x = jnp.pad(x, ((0, B_pad - B), (0, 0)))

    # Weights for layer 1 stay (in, out); layers 2/3 are fed transposed (PyTorch
    # (out, in) layout) with column biases so the kernel works batch-on-lanes.
    w1 = params["w1"].astype(f32)                      # (D, 8)
    b1 = params["b1"].reshape(1, 8).astype(f32)        # (1, 8)
    w2t = params["w2"].T.astype(f32)                   # (4, 8)
    b2c = params["b2"].reshape(4, 1).astype(f32)       # (4, 1)
    w3t = params["w3"].T.astype(f32)                   # (1, 4)
    b3c = params["b3"].reshape(1, 1).astype(f32)       # (1, 1)

    out = pl.pallas_call(
        mlp_kernel,
        out_shape=jax.ShapeDtypeStruct((1, B_pad), f32),
        grid=(nb,),
        in_specs=[
            pl.BlockSpec((tb, D), lambda i: (i, 0)),   # x streamed over batch tiles
            _const_spec(w1.shape), _const_spec(b1.shape),
            _const_spec(w2t.shape), _const_spec(b2c.shape),
            _const_spec(w3t.shape), _const_spec(b3c.shape),
        ],
        out_specs=pl.BlockSpec((1, tb), lambda i: (0, i)),  # lane-dense output row
        compiler_params=pltpu.CompilerParams(
            dimension_semantics=("parallel",),
            vmem_limit_bytes=_VMEM_LIMIT_BYTES,
        ),
    )(x, w1, b1, w2t, b2c, w3t, b3c)

    # (1, B_pad) row-major == batch order; back to (B, 1), dropping pad rows.
    return out.reshape(B_pad, 1)[:B]


def init_params(key, input_size):
    """Deterministic init mimicking nn.Linear's U(-1/sqrt(fan_in), 1/sqrt(fan_in))."""
    def linear(k, fan_in, fan_out):
        kw, kb = jax.random.split(k)
        bound = 1.0 / jnp.sqrt(float(fan_in))
        w = jax.random.uniform(kw, (fan_in, fan_out), jnp.float32, -bound, bound)
        b = jax.random.uniform(kb, (1, fan_out), jnp.float32, -bound, bound)
        return w, b

    k1, k2, k3 = jax.random.split(key, 3)
    w1, b1 = linear(k1, input_size, 8)
    w2, b2 = linear(k2, 8, 4)
    w3, b3 = linear(k3, 4, 1)
    return {"w1": w1, "b1": b1, "w2": w2, "b2": b2, "w3": w3, "b3": b3}


def mlp_reference(x, p):
    h1 = jnp.maximum(x @ p["w1"] + p["b1"], 0.0)
    h2 = jnp.maximum(h1 @ p["w2"] + p["b2"], 0.0)
    return h2 @ p["w3"] + p["b3"]


if __name__ == "__main__":
    key = jax.random.PRNGKey(0)
    k_param, k_x1, k_x2 = jax.random.split(key, 3)

    input_size = 16
    params = init_params(k_param, input_size)

    # Case 1: small batch, single tile (typical time-series forecasting usage).
    B1 = 8
    x1 = jax.random.normal(k_x1, (B1, input_size), jnp.float32)
    out1 = jax.block_until_ready(mlp_forward(x1, params))
    ref1 = mlp_reference(x1, params)
    assert out1.shape == (B1, 1)
    assert jnp.allclose(out1, ref1, atol=1e-4, rtol=1e-4)

    # Case 2: multi-tile path with tail padding (B not divisible by tb, grid > 1,
    # lane-dense (1, tb) output blocks, megacore "parallel" grid axis).
    B2 = 300
    x2 = jax.random.normal(k_x2, (B2, input_size), jnp.float32)
    out2 = jax.block_until_ready(mlp_forward(x2, params, tb=128))
    ref2 = mlp_reference(x2, params)
    assert out2.shape == (B2, 1)
    assert jnp.allclose(out2, ref2, atol=1e-4, rtol=1e-4)

    print("KERNEL_OK")
</pallas_src>

<mosaic_0001>
module attributes {stable_mosaic.version = 11 : i64} {
  func.func @mlp_kernel(%arg0: i32, %arg1: memref<8x16xf32, #tpu.memory_space<vmem>>, %arg2: memref<16x8xf32, #tpu.memory_space<vmem>>, %arg3: memref<1x8xf32, #tpu.memory_space<vmem>>, %arg4: memref<4x8xf32, #tpu.memory_space<vmem>>, %arg5: memref<4x1xf32, #tpu.memory_space<vmem>>, %arg6: memref<1x4xf32, #tpu.memory_space<vmem>>, %arg7: memref<1x1xf32, #tpu.memory_space<vmem>>, %arg8: memref<1x8xf32, #tpu.memory_space<vmem>>) attributes {dimension_semantics = [#tpu.dimension_semantics<parallel>], iteration_bounds = array<i64: 1>, scalar_prefetch = 0 : i64, scratch_operands = 0 : i64, tpu.core_type = #tpu.core_type<tc>, window_params = [{transform_indices = @transform_0, window_bounds = array<i64: 8, 16>}, {pipeline_mode = #tpu.pipeline_mode<synchronous>, transform_indices = @transform_1, window_bounds = array<i64: 16, 8>}, {pipeline_mode = #tpu.pipeline_mode<synchronous>, transform_indices = @transform_2, window_bounds = array<i64: 1, 8>}, {pipeline_mode = #tpu.pipeline_mode<synchronous>, transform_indices = @transform_3, window_bounds = array<i64: 4, 8>}, {pipeline_mode = #tpu.pipeline_mode<synchronous>, transform_indices = @transform_4, window_bounds = array<i64: 4, 1>}, {pipeline_mode = #tpu.pipeline_mode<synchronous>, transform_indices = @transform_5, window_bounds = array<i64: 1, 4>}, {pipeline_mode = #tpu.pipeline_mode<synchronous>, transform_indices = @transform_6, window_bounds = array<i64: 1, 1>}, {transform_indices = @transform_7, window_bounds = array<i64: 1, 8>}]} {
    %c0 = arith.constant 0 : index
    %c0_0 = arith.constant 0 : index
    %0 = vector.load %arg1[%c0, %c0_0] : memref<8x16xf32, #tpu.memory_space<vmem>>, vector<8x16xf32>
    %c0_1 = arith.constant 0 : index
    %c0_2 = arith.constant 0 : index
    %1 = vector.load %arg2[%c0_1, %c0_2] : memref<16x8xf32, #tpu.memory_space<vmem>>, vector<16x8xf32>
    %cst = arith.constant dense<0.000000e+00> : vector<8x8xf32>
    %2 = tpu.matmul %0, %1, %cst {dimension_numbers = #tpu.dot_dimension_numbers<[1], [0], [0], [1], [0, 0, 1, 1], [], []>} : vector<8x16xf32>, vector<16x8xf32>, vector<8x8xf32> -> vector<8x8xf32>
    %c0_3 = arith.constant 0 : index
    %c0_4 = arith.constant 0 : index
    %3 = vector.load %arg3[%c0_3, %c0_4] : memref<1x8xf32, #tpu.memory_space<vmem>>, vector<1x8xf32>
    %4 = vector.broadcast %3 : vector<1x8xf32> to vector<8x8xf32>
    %5 = arith.addf %2, %4 : vector<8x8xf32>
    %cst_5 = arith.constant 0.000000e+00 : f32
    %6 = vector.broadcast %cst_5 : f32 to vector<8x8xf32>
    %7 = arith.maximumf %5, %6 : vector<8x8xf32>
    %8 = tpu.transpose %7, [1, 0] : vector<8x8xf32> -> vector<8x8xf32>
    %c0_6 = arith.constant 0 : index
    %c0_7 = arith.constant 0 : index
    %9 = vector.load %arg4[%c0_6, %c0_7] : memref<4x8xf32, #tpu.memory_space<vmem>>, vector<4x8xf32>
    %cst_8 = arith.constant dense<0.000000e+00> : vector<4x8xf32>
    %10 = tpu.matmul %9, %8, %cst_8 {dimension_numbers = #tpu.dot_dimension_numbers<[1], [0], [0], [1], [0, 0, 1, 1], [], []>} : vector<4x8xf32>, vector<8x8xf32>, vector<4x8xf32> -> vector<4x8xf32>
    %c0_9 = arith.constant 0 : index
    %c0_10 = arith.constant 0 : index
    %11 = vector.load %arg5[%c0_9, %c0_10] : memref<4x1xf32, #tpu.memory_space<vmem>>, vector<4x1xf32>
    %12 = vector.broadcast %11 : vector<4x1xf32> to vector<4x8xf32>
    %13 = arith.addf %10, %12 : vector<4x8xf32>
    %cst_11 = arith.constant 0.000000e+00 : f32
    %14 = vector.broadcast %cst_11 : f32 to vector<4x8xf32>
    %15 = arith.maximumf %13, %14 : vector<4x8xf32>
    %c0_12 = arith.constant 0 : index
    %c0_13 = arith.constant 0 : index
    %16 = vector.load %arg6[%c0_12, %c0_13] : memref<1x4xf32, #tpu.memory_space<vmem>>, vector<1x4xf32>
    %cst_14 = arith.constant dense<0.000000e+00> : vector<1x8xf32>
    %17 = tpu.matmul %16, %15, %cst_14 {dimension_numbers = #tpu.dot_dimension_numbers<[1], [0], [0], [1], [0, 0, 1, 1], [], []>} : vector<1x4xf32>, vector<4x8xf32>, vector<1x8xf32> -> vector<1x8xf32>
    %c0_15 = arith.constant 0 : index
    %c0_16 = arith.constant 0 : index
    %18 = vector.load %arg7[%c0_15, %c0_16] : memref<1x1xf32, #tpu.memory_space<vmem>>, vector<1x1xf32>
    %19 = vector.broadcast %18 : vector<1x1xf32> to vector<1x8xf32>
    %20 = arith.addf %17, %19 : vector<1x8xf32>
    %c0_17 = arith.constant 0 : index
    %c0_18 = arith.constant 0 : index
    %21 = vector.load %arg8[%c0_17, %c0_18] : memref<1x8xf32, #tpu.memory_space<vmem>>, vector<1x8xf32>
    tpu.vector_store %arg8[%c0_17, %c0_18], %20 {strides = array<i32>} : memref<1x8xf32, #tpu.memory_space<vmem>>, vector<1x8xf32>,
    return
  }
  func.func @transform_0(%arg0: i32) -> (i32, i32) {
    %c0_i32 = arith.constant 0 : i32
    %c0_i32_0 = arith.constant 0 : i32
    return %arg0, %c0_i32 : i32, i32
  }
  func.func @transform_1(%arg0: i32) -> (i32, i32) {
    %c0_i32 = arith.constant 0 : i32
    %c0_i32_0 = arith.constant 0 : i32
    %c0_i32_1 = arith.constant 0 : i32
    return %c0_i32, %c0_i32_0 : i32, i32
  }
  func.func @transform_2(%arg0: i32) -> (i32, i32) {
    %c0_i32 = arith.constant 0 : i32
    %c0_i32_0 = arith.constant 0 : i32
    %c0_i32_1 = arith.constant 0 : i32
    return %c0_i32, %c0_i32_0 : i32, i32
  }
  func.func @transform_3(%arg0: i32) -> (i32, i32) {
    %c0_i32 = arith.constant 0 : i32
    %c0_i32_0 = arith.constant 0 : i32
    %c0_i32_1 = arith.constant 0 : i32
    return %c0_i32, %c0_i32_0 : i32, i32
  }
  func.func @transform_4(%arg0: i32) -> (i32, i32) {
    %c0_i32 = arith.constant 0 : i32
    %c0_i32_0 = arith.constant 0 : i32
    %c0_i32_1 = arith.constant 0 : i32
    return %c0_i32, %c0_i32_0 : i32, i32
  }
  func.func @transform_5(%arg0: i32) -> (i32, i32) {
    %c0_i32 = arith.constant 0 : i32
    %c0_i32_0 = arith.constant 0 : i32
    %c0_i32_1 = arith.constant 0 : i32
    return %c0_i32, %c0_i32_0 : i32, i32
  }
  func.func @transform_6(%arg0: i32) -> (i32, i32) {
    %c0_i32 = arith.constant 0 : i32
    %c0_i32_0 = arith.constant 0 : i32
    %c0_i32_1 = arith.constant 0 : i32
    return %c0_i32, %c0_i32_0 : i32, i32
  }
  func.func @transform_7(%arg0: i32) -> (i32, i32) {
    %c0_i32 = arith.constant 0 : i32
    %c0_i32_0 = arith.constant 0 : i32
    return %c0_i32, %arg0 : i32, i32
  }
}

</mosaic_0001>

<llo_original>
// kernel: tpu_custom_call.1
$region0: #{tpu_custom_call.1}
  #allocation0 [shape = 'u32[]', space=smem, size = 0x4, offset = 0x4, fixed_abs, tag = 'smem constant byte address 0x4 - core index']
  #allocation1 [shape = 'u32[144,128]{1,0:T(1,128)}', space=vmem, size = 0x12000, scoped, tag = 'internal scratch']
  #allocation2 [shape = 'f32[1,1]{1,0:T(1,128)S(1)}', space=vmem, size = 0x200, scoped, tag = 'scoped memory for tpu_custom_call.1']
  %s0 = inlined_call_operand.vmem [shape: f32[8,16], index: 0, kind: input, shape index: {}]
  %s1 = inlined_call_operand.vmem [shape: f32[16,8], index: 1, kind: input, shape index: {}]
  %s2 = inlined_call_operand.vmem [shape: f32[1,8], index: 2, kind: input, shape index: {}]
  %s3 = inlined_call_operand.vmem [shape: f32[4,8], index: 3, kind: input, shape index: {}]
  %s4 = inlined_call_operand.vmem [shape: f32[4,1], index: 4, kind: input, shape index: {}]
  %s5 = inlined_call_operand.vmem [shape: f32[1,4], index: 5, kind: input, shape index: {}]
  %s6 = inlined_call_operand.<no memory space> [shape: f32[1,1], index: 6, kind: input, shape index: {}]
  %s7 = inlined_call_operand.hbm [shape: f32[1,8], index: 7, kind: output, shape index: {}]
  %s8 = sld [smem:[#allocation0]]
  $region38: #{tpu_custom_call.1} parent=0
    _
  %s10 = ssub.s32 1, %s8
  %s11 = scalar_select 0, %s10, %s8
  %v12 = vstv %s6
  %13 = vst [vmem:[#allocation2] sm:$0x1] %v12
  $region1: #{tpu_custom_call.1} parent=0
    #allocation3 [shape = 'u8[512]{0}', space=vmem, size = 0x400, scoped, tag = 'output window, operand 0, single buffered']
    #allocation4 [shape = 's32[1]{0}', space=sflag, size = 0x4, scoped, tag = 'scoped memory for tpu_custom_call.1']
    %14 = vsyncpa [#allocation4], 0
    // Predicated region
    $region2: #{tpu_custom_call.1} parent=1 // pred_check
      _
    $region3: #{tpu_custom_call.1} parent=1 // pred_check_branch
      %16 = sbr.rel (0) target = $region5
    $region4: #{tpu_custom_call.1} parent=1 // pred_region
      _
    $region5: #{tpu_custom_call.1} parent=1 // pred_fallthru
      _
    // Predicated region
    $region6: #{tpu_custom_call.1} parent=1 // pred_check
      _
    $region7: #{tpu_custom_call.1} parent=1 // pred_check_branch
      %18 = sbr.rel (0) target = $region9
    $region8: #{tpu_custom_call.1} parent=1 // pred_region
      _
    $region9: #{tpu_custom_call.1} parent=1 // pred_fallthru
      _
    // Predicated region
    $region10: #{tpu_custom_call.1} parent=1 // pred_check
      _
    $region11: #{tpu_custom_call.1} parent=1 // pred_check_branch
      %20 = sbr.rel (0) target = $region13
    $region12: #{tpu_custom_call.1} parent=1 // pred_region
      _
    $region13: #{tpu_custom_call.1} parent=1 // pred_fallthru
      _
    // Predicated region
    $region14: #{tpu_custom_call.1} parent=1 // pred_check
      _
    $region15: #{tpu_custom_call.1} parent=1 // pred_check_branch
      %22 = sbr.rel (0) target = $region17
    $region16: #{tpu_custom_call.1} parent=1 // pred_region
      _
    $region17: #{tpu_custom_call.1} parent=1 // pred_fallthru
      _
    // Predicated region
    $region18: #{tpu_custom_call.1} parent=1 // pred_check
      _
    $region19: #{tpu_custom_call.1} parent=1 // pred_check_branch
      %24 = sbr.rel (0) target = $region21
    $region20: #{tpu_custom_call.1} parent=1 // pred_region
      _
    $region21: #{tpu_custom_call.1} parent=1 // pred_fallthru
      _
    // Predicated region
    $region22: #{tpu_custom_call.1} parent=1 // pred_check
      _
    $region23: #{tpu_custom_call.1} parent=1 // pred_check_branch
      %26 = sbr.rel (0) target = $region25
    $region24: #{tpu_custom_call.1} parent=1 // pred_region
      _
    $region25: #{tpu_custom_call.1} parent=1 // pred_fallthru
      _
    // Predicated region
    $region26: #{tpu_custom_call.1} parent=1 // pred_check
      _
    $region27: #{tpu_custom_call.1} parent=1 // pred_check_branch
      %28 = sbr.rel (0) target = $region29
    $region28: #{tpu_custom_call.1} parent=1 // pred_region
      _
    $region29: #{tpu_custom_call.1} parent=1 // pred_fallthru
      _
    %v29 = vld [vmem:[%s0] sm:$0xff]
    %v30 = vld [vmem:[%s1] sm:$0xff]
    %v31 = vld [vmem:[%s1 + $0x8] sm:$0xff]
    %v32 = vld [vmem:[%s2] sm:$0x1]
    %v34 = vlaneseq
    %v35 = vshrl.u32 %v34, 7
    %v36 = vsub.s32 0, %v35
    %v37 = vrot.slane %v32, %v36
    %vm39 = vcmask 130048
    %v41 = vsel %vm39, %v29, 0
    %43 = vmatprep.subr.mxu0 0.0
    %44 = vmatpush1.msra.mxu0 %v30
    %45 = vmatprep.subr.mxu0 0.0
    %46 = vmatpush1.msra.mxu0 %v31
    %47 = vmatprep.subr.mxu0 0.0
    %48 = vmatpush1.msra.mxu0 0.0
    %49 = vmatprep.subr.mxu0 0.0
    %50 = vmatpush1.msra.mxu0 0.0
    %51 = vmatprep.subr.mxu0 0.0
    %52 = vmatpush1.msra.mxu0 0.0
    %53 = vmatprep.subr.mxu0 0.0
    %54 = vmatpush1.msra.mxu0 0.0
    %55 = vmatprep.subr.mxu0 0.0
    %56 = vmatpush1.msra.mxu0 0.0
    %57 = vmatprep.subr.mxu0 0.0
    %58 = vmatpush1.msra.mxu0 0.0
    %59 = vmatprep.subr.mxu0 0.0
    %60 = vmatpush1.msra.mxu0 0.0
    %61 = vmatprep.subr.mxu0 0.0
    %62 = vmatpush1.msra.mxu0 0.0
    %63 = vmatprep.subr.mxu0 0.0
    %64 = vmatpush1.msra.mxu0 0.0
    %65 = vmatprep.subr.mxu0 0.0
    %66 = vmatpush1.msra.mxu0 0.0
    %67 = vmatprep.subr.mxu0 0.0
    %68 = vmatpush1.msra.mxu0 0.0
    %69 = vmatprep.subr.mxu0 0.0
    %70 = vmatpush1.msra.mxu0 0.0
    %71 = vmatprep.subr.mxu0 0.0
    %72 = vmatpush1.msra.mxu0 0.0
    %73 = vmatprep.subr.mxu0 0.0
    %74 = vmatpush1.msra.mxu0 0.0
    %75 = vmatprep.subr.mxu0 0.0
    %76 = vmatpush1.msra.mxu0 0.0
    %77 = vmatprep.subr.mxu0 0.0
    %78 = vmatpush1.msra.mxu0 0.0
    %79 = vmatprep.subr.mxu0 0.0
    %80 = vmatpush1.msra.mxu0 0.0
    %81 = vmatprep.subr.mxu0 0.0
    %82 = vmatpush1.msra.mxu0 0.0
    %83 = vmatprep.subr.mxu0 0.0
    %84 = vmatpush1.msra.mxu0 0.0
    %85 = vmatprep.subr.mxu0 0.0
    %86 = vmatpush1.msra.mxu0 0.0
    %87 = vmatprep.subr.mxu0 0.0
    %88 = vmatpush1.msra.mxu0 0.0
    %89 = vmatprep.subr.mxu0 0.0
    %90 = vmatpush1.msra.mxu0 0.0
    %91 = vmatprep.subr.mxu0 0.0
    %92 = vmatpush1.msra.mxu0 0.0
    %93 = vmatprep.subr.mxu0 0.0
    %94 = vmatpush1.msra.mxu0 0.0
    %95 = vmatprep.subr.mxu0 0.0
    %96 = vmatpush1.msra.mxu0 0.0
    %97 = vmatprep.subr.mxu0 0.0
    %98 = vmatpush1.msra.mxu0 0.0
    %99 = vmatprep.subr.mxu0 0.0
    %100 = vmatpush1.msra.mxu0 0.0
    %101 = vmatprep.subr.mxu0 0.0
    %102 = vmatpush1.msra.mxu0 0.0
    %103 = vmatprep.subr.mxu0 0.0
    %104 = vmatpush1.msra.mxu0 0.0
    %105 = vmatprep.subr.mxu0 0.0
    %106 = vmatpush1.msra.mxu0 0.0
    %107 = vmatprep.mubr.f32.mxu0 0.0
    %108 = vmatmul.mubr.f32.gmra.mrb[0].mxu0 %v41
    %v109 = vpop.f32.mrb[0].mxu0
    %v110 = vadd.f32 %v37, %v109
    %v111 = vpop.f32.mrb[0].mxu0
    %112 = vdwg.mxu0
    %v113 = vmax.f32 %v110, 0.0
    %v114 = vld [vmem:[%s3] sm:$0xf]
    %v115 = vld [vmem:[%s4] sm:$0xf]
    %117 = vset.pattern.permute.xlu0 0
    %118 = vperm.xlu0 %117, %v115
    %v119 = vpop.permute.xlu0 %118
    %vm121 = vcmask 64512
    %v123 = vsel %vm121, %v114, 0
    %v126 = vsel %vm121, %v113, 0
    %128 = vmatprep.subr.mxu0 0.0
    %129 = vmatpush1.xpose.msra.mxu0 %v126
    %130 = vmatprep.subr.mxu0 0.0
    %131 = vmatpush1.xpose.msra.mxu0 0.0
    %132 = vmatprep.subr.mxu0 0.0
    %133 = vmatpush1.xpose.msra.mxu0 0.0
    %134 = vmatprep.subr.mxu0 0.0
    %135 = vmatpush1.xpose.msra.mxu0 0.0
    %136 = vmatprep.subr.mxu0 0.0
    %137 = vmatpush1.xpose.msra.mxu0 0.0
    %138 = vmatprep.subr.mxu0 0.0
    %139 = vmatpush1.xpose.msra.mxu0 0.0
    %140 = vmatprep.subr.mxu0 0.0
    %141 = vmatpush1.xpose.msra.mxu0 0.0
    %142 = vmatprep.subr.mxu0 0.0
    %143 = vmatpush1.xpose.msra.mxu0 0.0
    %144 = vmatprep.subr.mxu0 0.0
    %145 = vmatpush1.xpose.msra.mxu0 0.0
    %146 = vmatprep.subr.mxu0 0.0
    %147 = vmatpush1.xpose.msra.mxu0 0.0
    %148 = vmatprep.subr.mxu0 0.0
    %149 = vmatpush1.xpose.msra.mxu0 0.0
    %150 = vmatprep.subr.mxu0 0.0
    %151 = vmatpush1.xpose.msra.mxu0 0.0
    %152 = vmatprep.subr.mxu0 0.0
    %153 = vmatpush1.xpose.msra.mxu0 0.0
    %154 = vmatprep.subr.mxu0 0.0
    %155 = vmatpush1.xpose.msra.mxu0 0.0
    %156 = vmatprep.subr.mxu0 0.0
    %157 = vmatpush1.xpose.msra.mxu0 0.0
    %158 = vmatprep.subr.mxu0 0.0
    %159 = vmatpush1.xpose.msra.mxu0 0.0
    %160 = vmatprep.subr.mxu0 0.0
    %161 = vmatpush1.xpose.msra.mxu0 0.0
    %162 = vmatprep.subr.mxu0 0.0
    %163 = vmatpush1.xpose.msra.mxu0 0.0
    %164 = vmatprep.subr.mxu0 0.0
    %165 = vmatpush1.xpose.msra.mxu0 0.0
    %166 = vmatprep.subr.mxu0 0.0
    %167 = vmatpush1.xpose.msra.mxu0 0.0
    %168 = vmatprep.subr.mxu0 0.0
    %169 = vmatpush1.xpose.msra.mxu0 0.0
    %170 = vmatprep.subr.mxu0 0.0
    %171 = vmatpush1.xpose.msra.mxu0 0.0
    %172 = vmatprep.subr.mxu0 0.0
    %173 = vmatpush1.xpose.msra.mxu0 0.0
    %174 = vmatprep.subr.mxu0 0.0
    %175 = vmatpush1.xpose.msra.mxu0 0.0
    %176 = vmatprep.subr.mxu0 0.0
    %177 = vmatpush1.xpose.msra.mxu0 0.0
    %178 = vmatprep.subr.mxu0 0.0
    %179 = vmatpush1.xpose.msra.mxu0 0.0
    %180 = vmatprep.subr.mxu0 0.0
    %181 = vmatpush1.xpose.msra.mxu0 0.0
    %182 = vmatprep.subr.mxu0 0.0
    %183 = vmatpush1.xpose.msra.mxu0 0.0
    %184 = vmatprep.subr.mxu0 0.0
    %185 = vmatpush1.xpose.msra.mxu0 0.0
    %186 = vmatprep.subr.mxu0 0.0
    %187 = vmatpush1.xpose.msra.mxu0 0.0
    %188 = vmatprep.subr.mxu0 0.0
    %189 = vmatpush1.xpose.msra.mxu0 0.0
    %190 = vmatprep.subr.mxu0 0.0
    %191 = vmatpush1.xpose.msra.mxu0 0.0
    %192 = vmatprep.mubr.f32.mxu0 0.0
    %193 = vmatmul.mubr.f32.gmra.mrb[0].mxu0 %v123
    %v194 = vpop.f32.mrb[0].mxu0
    %v195 = vadd.f32 %v119, %v194
    %v196 = vpop.f32.mrb[0].mxu0
    %197 = vdwg.mxu0
    %v198 = vmax.f32 %v195, 0.0
    %v199 = vld [vmem:[%s5] sm:$0x1]
    %v200 = vld [vmem:[#allocation2] sm:$0x1]
    %202 = vset.pattern.permute.xlu0 0
    %203 = vperm.xlu0 %202, %v200
    %v204 = vpop.permute.xlu0 %203
    %v206 = vlaneseq
    %v207 = vshrl.u32 %v206, 7
    %v208 = vsub.s32 0, %v207
    %v209 = vrot.slane %v204, %v208
    %vm210 = vcmask 31744
    %v212 = vsel %vm210, %v199, 0
    %vm214 = vcmask 1043456
    %v216 = vsel %vm214, %v198, 0
    %218 = vmatprep.subr.mxu0 0.0
    %219 = vmatpush1.msra.mxu0 %v216
    %220 = vmatprep.subr.mxu0 0.0
    %221 = vmatpush1.msra.mxu0 0.0
    %222 = vmatprep.subr.mxu0 0.0
    %223 = vmatpush1.msra.mxu0 0.0
    %224 = vmatprep.subr.mxu0 0.0
    %225 = vmatpush1.msra.mxu0 0.0
    %226 = vmatprep.subr.mxu0 0.0
    %227 = vmatpush1.msra.mxu0 0.0
    %228 = vmatprep.subr.mxu0 0.0
    %229 = vmatpush1.msra.mxu0 0.0
    %230 = vmatprep.subr.mxu0 0.0
    %231 = vmatpush1.msra.mxu0 0.0
    %232 = vmatprep.subr.mxu0 0.0
    %233 = vmatpush1.msra.mxu0 0.0
    %234 = vmatprep.subr.mxu0 0.0
    %235 = vmatpush1.msra.mxu0 0.0
    %236 = vmatprep.subr.mxu0 0.0
    %237 = vmatpush1.msra.mxu0 0.0
    %238 = vmatprep.subr.mxu0 0.0
    %239 = vmatpush1.msra.mxu0 0.0
    %240 = vmatprep.subr.mxu0 0.0
    %241 = vmatpush1.msra.mxu0 0.0
    %242 = vmatprep.subr.mxu0 0.0
    %243 = vmatpush1.msra.mxu0 0.0
    %244 = vmatprep.subr.mxu0 0.0
    %245 = vmatpush1.msra.mxu0 0.0
    %246 = vmatprep.subr.mxu0 0.0
    %247 = vmatpush1.msra.mxu0 0.0
    %248 = vmatprep.subr.mxu0 0.0
    %249 = vmatpush1.msra.mxu0 0.0
    %250 = vmatprep.subr.mxu0 0.0
    %251 = vmatpush1.msra.mxu0 0.0
    %252 = vmatprep.subr.mxu0 0.0
    %253 = vmatpush1.msra.mxu0 0.0
    %254 = vmatprep.subr.mxu0 0.0
    %255 = vmatpush1.msra.mxu0 0.0
    %256 = vmatprep.subr.mxu0 0.0
    %257 = vmatpush1.msra.mxu0 0.0
    %258 = vmatprep.subr.mxu0 0.0
    %259 = vmatpush1.msra.mxu0 0.0
    %260 = vmatprep.subr.mxu0 0.0
    %261 = vmatpush1.msra.mxu0 0.0
    %262 = vmatprep.subr.mxu0 0.0
    %263 = vmatpush1.msra.mxu0 0.0
    %264 = vmatprep.subr.mxu0 0.0
    %265 = vmatpush1.msra.mxu0 0.0
    %266 = vmatprep.subr.mxu0 0.0
    %267 = vmatpush1.msra.mxu0 0.0
    %268 = vmatprep.subr.mxu0 0.0
    %269 = vmatpush1.msra.mxu0 0.0
    %270 = vmatprep.subr.mxu0 0.0
    %271 = vmatpush1.msra.mxu0 0.0
    %272 = vmatprep.subr.mxu0 0.0
    %273 = vmatpush1.msra.mxu0 0.0
    %274 = vmatprep.subr.mxu0 0.0
    %275 = vmatpush1.msra.mxu0 0.0
    %276 = vmatprep.subr.mxu0 0.0
    %277 = vmatpush1.msra.mxu0 0.0
    %278 = vmatprep.subr.mxu0 0.0
    %279 = vmatpush1.msra.mxu0 0.0
    %280 = vmatprep.subr.mxu0 0.0
    %281 = vmatpush1.msra.mxu0 0.0
    %282 = vmatprep.mubr.f32.mxu0 0.0
    %283 = vmatmul.mubr.f32.gmra.mrb[0].mxu0 %v212
    %v284 = vpop.f32.mrb[0].mxu0
    %v285 = vadd.f32 %v209, %v284
    %v286 = vpop.f32.mrb[0].mxu0
    %287 = vdwg.mxu0
    %vm288 = vcmask 57344
    %289 = vst.msk [vmem:[#allocation3] sm:$0x1] %vm288, %v285
    // Predicated region
    $region30: #{tpu_custom_call.1} parent=1 // pred_check
      _
    $region31: #{tpu_custom_call.1} parent=1 // pred_check_branch
      %291 = sbr.rel (0) target = $region33
    $region32: #{tpu_custom_call.1} parent=1 // pred_region
      %s293 = ssub.s32 16, 16
      %294 = vsyncadd [#allocation4], %s293
      %s296 = sshll.u32 [#allocation3], 4
      %s297 = int_to_ptr.vmem [resolvable:$true] %s296
      %299 = dma.vmem_to_hbm [thread:$0]  %s297, 16, %s7, [#allocation4]
    $region33: #{tpu_custom_call.1} parent=1 // pred_fallthru
      _
    // Predicated region
    $region34: #{tpu_custom_call.1} parent=1 // pred_check
      _
    $region35: #{tpu_custom_call.1} parent=1 // pred_check_branch
      %301 = sbr.rel (0) target = $region37
    $region36: #{tpu_custom_call.1} parent=1 // pred_region
      %302 = dma.done [#allocation4], 16
    $region37: #{tpu_custom_call.1} parent=1 // pred_fallthru
      _
    %303 = vsyncpa [#allocation4], 1

</llo_original>
